<compile_context>
chip_gen: v7x
topology: tpu7x:2x2x1
jax: 0.10.0
libtpu: 0.0.40
codegen_flags: <defaults>
</compile_context>

<pallas_src>
import functools
import math

import jax
import jax.numpy as jnp
from jax.experimental import pallas as pl
from jax.experimental.pallas import tpu as pltpu


def _round_up(x, m):
    return ((x + m - 1) // m) * m


# Conservative streaming-tile budget + explicit scoped-VMEM limit; both are safe on
# every generation (v5e 16 MiB scoped default / 128 MiB phys, v6e 32/128, v7x 32/64).
_VMEM_TILE_BUDGET = 20 * 1024 * 1024
_VMEM_LIMIT_BYTES = 32 * 1024 * 1024


# ----------------------------------------------------------------------------
# Pallas kernel: one (tm, tn) output tile of  act(V @ W + B)
# ----------------------------------------------------------------------------
def linear_embedding_kernel(v_ref, w_ref, b_ref, o_ref, *, act):
    # v_ref : (tm, F)   input rows (f32 or bf16)
    # w_ref : (F, tn)   weights, pre-cast to bf16 on the host
    # b_ref : (1, tn)   f32 bias row
    # o_ref : (tm, tn)  f32 output tile
    v = v_ref[...].astype(jnp.bfloat16)          # no-op if V is already bf16
    y = jnp.dot(v, w_ref[...], preferred_element_type=jnp.float32)
    y = y + b_ref[...]

    if act == "relu":
        y = jnp.maximum(y, 0.0)
    elif act == "softmax":
        # tn == C for softmax (enforced by the wrapper), so the row-wise
        # reduction sees the whole class dim.  Normalize via the EUP reciprocal.
        m = jnp.max(y, axis=-1, keepdims=True)
        e = jnp.exp(y - m)
        y = e * pl.reciprocal(jnp.sum(e, axis=-1, keepdims=True), approx=True)
    # else: identity

    o_ref[...] = y


# ----------------------------------------------------------------------------
# Tile-size selection (VMEM-budgeted, generation-agnostic conservative budget)
# ----------------------------------------------------------------------------
def _choose_tiles(M, F, C, act, v_itemsize, tm_override=None, tn_override=None):
    budget = _VMEM_TILE_BUDGET

    # Class-dim tile: keep the whole row for softmax; otherwise tile C when the
    # double-buffered bf16 W block would not fit comfortably in the budget.
    if tn_override is not None and act != "softmax":
        tn = tn_override
    elif act == "softmax":
        tn = C
    elif 2 * F * C * 2 <= budget // 2:
        tn = C
    else:
        tn = C
        for t in (2048, 1024, 512, 256, 128):
            if C % t == 0 and 2 * F * t * 2 <= budget // 2:
                tn = t
                break
    # TODO(synk): add a K (contraction) grid axis with an f32 acc scratch for
    # very large F; currently the full F dim is taken as a single block.

    if tm_override is not None:
        return tm_override, tn

    # Row tile from the remaining budget (double-buffered V rows + out rows).
    w_buf = 2 * F * tn * 2 + 2 * tn * 4
    per_row = 2 * (F * v_itemsize + tn * 4)
    tm = max((budget - w_buf) // per_row, 8)
    tm = min(int(tm), 1024)
    tm = (tm // 8) * 8
    if M <= tm:
        tm = M                    # single full-extent row block: no padding needed
    elif M < 2 * tm:
        tm = _round_up(-(-M // 2), 8)   # >= 2 row-grid steps for v7x megacore
    return tm, tn


# ----------------------------------------------------------------------------
# Parameter packing (do ONCE at init and cache; reuse across forward calls)
# ----------------------------------------------------------------------------
def prepare_params(W, B):
    """W -> bf16 (MXU-native, halves W DMA bytes); B -> (1, C) f32 row."""
    return W.astype(jnp.bfloat16), jnp.asarray(B, jnp.float32).reshape(1, -1)


# ----------------------------------------------------------------------------
# Host-side forward
# ----------------------------------------------------------------------------
def linear_embedding_forward(V, W_packed, B_row, use_act="relu",
                             tm_override=None, tn_override=None):
    """V: (..., F); W_packed: (F, C) bf16; B_row: (1, C) f32 (from prepare_params)."""
    *lead, F = V.shape
    C = B_row.shape[-1]
    M = int(math.prod(lead)) if lead else 1

    tm, tn = _choose_tiles(M, F, C, use_act, V.dtype.itemsize,
                           tm_override, tn_override)
    grid_m = -(-M // tm)
    grid_n = -(-C // tn)
    m_pad = grid_m * tm

    v2 = V.reshape(M, F)
    if m_pad != M:
        # Pad rows only when actually required; padded rows are sliced off below.
        v2 = jnp.zeros((m_pad, F), V.dtype).at[:M, :].set(v2)

    kernel = functools.partial(linear_embedding_kernel, act=use_act)

    cost = pl.CostEstimate(
        flops=2 * M * F * C,
        transcendentals=M * C if use_act == "softmax" else 0,
        bytes_accessed=(v2.size * v2.dtype.itemsize          # V
                        + W_packed.size * 2                  # bf16 W
                        + C * 4                              # B
                        + m_pad * C * 4))                    # out

    out = pl.pallas_call(
        kernel,
        out_shape=jax.ShapeDtypeStruct((m_pad, C), jnp.float32),
        grid=(grid_m, grid_n),
        in_specs=[
            pl.BlockSpec((tm, F), lambda i, j: (i, 0)),    # V row tile
            pl.BlockSpec((F, tn), lambda i, j: (0, j)),    # bf16 weight tile
            pl.BlockSpec((1, tn), lambda i, j: (0, j)),    # f32 bias row
        ],
        out_specs=pl.BlockSpec((tm, tn), lambda i, j: (i, j)),
        compiler_params=pltpu.CompilerParams(
            dimension_semantics=("parallel", "parallel"),
            vmem_limit_bytes=_VMEM_LIMIT_BYTES),
        cost_estimate=cost,
    )(v2, W_packed, B_row)

    if m_pad != M:
        out = out[:M]
    return out.reshape(*lead, C)


# ----------------------------------------------------------------------------
# Parameter init matching the PyTorch module
# ----------------------------------------------------------------------------
def init_params(key, input_size, output_size):
    k_w, k_b = jax.random.split(key)
    # xavier_normal_: std = sqrt(2 / (fan_in + fan_out))
    std_w = math.sqrt(2.0 / (input_size + output_size))
    W = std_w * jax.random.normal(k_w, (input_size, output_size), jnp.float32)
    # normal_(mean=1e-4, std=1e-5)
    B = 1e-4 + 1e-5 * jax.random.normal(k_b, (output_size,), jnp.float32)
    return W, B


# ----------------------------------------------------------------------------
if __name__ == "__main__":
    key = jax.random.PRNGKey(0)
    k_v, k_p, k_v2, k_p2 = jax.random.split(key, 4)

    # Demo config consistent with the module (small shapes).
    batch, seq = 2, 8
    input_size, output_size = 32, 64

    V = jax.random.normal(k_v, (batch, seq, input_size), jnp.float32)
    W, B = init_params(k_p, input_size, output_size)
    W_packed, B_row = prepare_params(W, B)       # pack ONCE, reuse across calls

    # ReLU path (module default).
    out = linear_embedding_forward(V, W_packed, B_row, use_act="relu")
    out = jax.block_until_ready(out)
    ref = jnp.maximum(jnp.einsum("bsf,fc->bsc", V, W) + B, 0.0)
    assert out.shape == (batch, seq, output_size)
    assert bool(jnp.all(out >= 0.0))
    assert jnp.allclose(out, ref, atol=3e-2, rtol=3e-2)

    # Softmax path: rows sum to ~1 (EUP approx reciprocal -> small relative error).
    out_sm = linear_embedding_forward(V, W_packed, B_row, use_act="softmax")
    out_sm = jax.block_until_ready(out_sm)
    assert jnp.allclose(jnp.sum(out_sm, axis=-1), 1.0, atol=5e-3)

    # Exercise the tiled 2-D grid + row-padding path (M=45 rows, C tiled by 128).
    b2, s2, f2, c2 = 5, 9, 32, 256
    V2 = jax.random.normal(k_v2, (b2, s2, f2), jnp.float32)
    W2, B2 = init_params(k_p2, f2, c2)
    W2p, B2r = prepare_params(W2, B2)
    out2 = linear_embedding_forward(V2, W2p, B2r, use_act="relu",
                                    tm_override=16, tn_override=128)
    out2 = jax.block_until_ready(out2)
    ref2 = jnp.maximum(jnp.einsum("bsf,fc->bsc", V2, W2) + B2, 0.0)
    assert out2.shape == (b2, s2, c2)
    assert jnp.allclose(out2, ref2, atol=3e-2, rtol=3e-2)

    print("KERNEL_OK")
</pallas_src>

<mosaic_0001>
module attributes {stable_mosaic.version = 11 : i64} {
  func.func @linear_embedding_kernel(%arg0: i32, %arg1: i32, %arg2: memref<16x32xf32, #tpu.memory_space<vmem>>, %arg3: memref<32x64xbf16, #tpu.memory_space<vmem>>, %arg4: memref<1x64xf32, #tpu.memory_space<vmem>>, %arg5: memref<16x64xf32, #tpu.memory_space<vmem>>) attributes {dimension_semantics = [#tpu.dimension_semantics<parallel>, #tpu.dimension_semantics<parallel>], iteration_bounds = array<i64: 1, 1>, scalar_prefetch = 0 : i64, scratch_operands = 0 : i64, tpu.core_type = #tpu.core_type<tc>, window_params = [{transform_indices = @transform_0, window_bounds = array<i64: 16, 32>}, {transform_indices = @transform_1, window_bounds = array<i64: 32, 64>}, {transform_indices = @transform_2, window_bounds = array<i64: 1, 64>}, {transform_indices = @transform_3, window_bounds = array<i64: 16, 64>}]} {
    %c0 = arith.constant 0 : index
    %c0_0 = arith.constant 0 : index
    %0 = vector.load %arg2[%c0, %c0_0] : memref<16x32xf32, #tpu.memory_space<vmem>>, vector<16x32xf32>
    %1 = arith.truncf %0 : vector<16x32xf32> to vector<16x32xbf16>
    %c0_1 = arith.constant 0 : index
    %c0_2 = arith.constant 0 : index
    %2 = vector.load %arg3[%c0_1, %c0_2] : memref<32x64xbf16, #tpu.memory_space<vmem>>, vector<32x64xbf16>
    %cst = arith.constant dense<0.000000e+00> : vector<16x64xf32>
    %3 = tpu.matmul %1, %2, %cst {dimension_numbers = #tpu.dot_dimension_numbers<[1], [0], [0], [1], [0, 0, 1, 1], [], []>} : vector<16x32xbf16>, vector<32x64xbf16>, vector<16x64xf32> -> vector<16x64xf32>
    %c0_3 = arith.constant 0 : index
    %c0_4 = arith.constant 0 : index
    %4 = vector.load %arg4[%c0_3, %c0_4] : memref<1x64xf32, #tpu.memory_space<vmem>>, vector<1x64xf32>
    %5 = vector.broadcast %4 : vector<1x64xf32> to vector<16x64xf32>
    %6 = arith.addf %3, %5 : vector<16x64xf32>
    %cst_5 = arith.constant 0.000000e+00 : f32
    %7 = vector.broadcast %cst_5 : f32 to vector<16x64xf32>
    %8 = arith.maximumf %6, %7 : vector<16x64xf32>
    %c0_6 = arith.constant 0 : index
    %c0_7 = arith.constant 0 : index
    %9 = vector.load %arg5[%c0_6, %c0_7] : memref<16x64xf32, #tpu.memory_space<vmem>>, vector<16x64xf32>
    tpu.vector_store %arg5[%c0_6, %c0_7], %8 {strides = array<i32>} : memref<16x64xf32, #tpu.memory_space<vmem>>, vector<16x64xf32>,
    return
  }
  func.func @transform_0(%arg0: i32, %arg1: i32) -> (i32, i32) {
    %c0_i32 = arith.constant 0 : i32
    %c0_i32_0 = arith.constant 0 : i32
    return %arg0, %c0_i32 : i32, i32
  }
  func.func @transform_1(%arg0: i32, %arg1: i32) -> (i32, i32) {
    %c0_i32 = arith.constant 0 : i32
    %c0_i32_0 = arith.constant 0 : i32
    return %c0_i32, %arg1 : i32, i32
  }
  func.func @transform_2(%arg0: i32, %arg1: i32) -> (i32, i32) {
    %c0_i32 = arith.constant 0 : i32
    %c0_i32_0 = arith.constant 0 : i32
    return %c0_i32, %arg1 : i32, i32
  }
  func.func @transform_3(%arg0: i32, %arg1: i32) -> (i32, i32) {
    %c0_i32 = arith.constant 0 : i32
    return %arg0, %arg1 : i32, i32
  }
}

</mosaic_0001>

<llo_original>
// kernel: tpu_custom_call.1
$region0: #{tpu_custom_call.1}
  #allocation0 [shape = 'u32[]', space=smem, size = 0x4, offset = 0x4, fixed_abs, tag = 'smem constant byte address 0x4 - core index']
  #allocation1 [shape = 'u32[144,128]{1,0:T(1,128)}', space=vmem, size = 0x12000, scoped, tag = 'internal scratch']
  %s0 = inlined_call_operand.hbm [shape: f32[16,32], index: 0, kind: input, shape index: {}]
  %s1 = inlined_call_operand.hbm [shape: bf16[32,64], index: 1, kind: input, shape index: {}]
  %s2 = inlined_call_operand.vmem [shape: f32[1,64], index: 2, kind: input, shape index: {}]
  %s3 = inlined_call_operand.hbm [shape: f32[16,64], index: 3, kind: output, shape index: {}]
  %s4 = sld [smem:[#allocation0]]
  $region30: #{tpu_custom_call.1} parent=0
    _
  %s6 = ssub.s32 1, %s4
  %s7 = scalar_select 0, %s6, %s4
  $region1: #{tpu_custom_call.1} parent=0
    #allocation2 [shape = 'u8[8192]{0}', space=vmem, size = 0x2000, scoped, tag = 'input window, operand 0, single buffered']
    #allocation3 [shape = 's32[1]{0}', space=sflag, size = 0x4, scoped, tag = 'scoped memory for tpu_custom_call.1']
    #allocation4 [shape = 's32[1]{0}', space=sflag, size = 0x4, scoped, tag = 'scoped memory for tpu_custom_call.1']
    #allocation5 [shape = 'u8[8192]{0}', space=vmem, size = 0x2000, scoped, tag = 'input window, operand 1, single buffered']
    #allocation6 [shape = 's32[1]{0}', space=sflag, size = 0x4, scoped, tag = 'scoped memory for tpu_custom_call.1']
    #allocation7 [shape = 'u8[8192]{0}', space=vmem, size = 0x2000, scoped, tag = 'output window, operand 0, single buffered']
    %8 = vsyncpa [#allocation3], 0
    %9 = vsyncpa [#allocation6], 0
    %10 = vsyncpa [#allocation4], 0
    // Predicated region
    $region2: #{tpu_custom_call.1} parent=1 // pred_check
      _
    $region3: #{tpu_custom_call.1} parent=1 // pred_check_branch
      %12 = sbr.rel (0) target = $region5
    $region4: #{tpu_custom_call.1} parent=1 // pred_region
      %s14 = ssub.s32 256, 256
      %15 = vsyncadd [#allocation3], %s14
      %s16 = sshll.u32 [#allocation2], 4
      %s17 = int_to_ptr.vmem [resolvable:$true] %s16
      %22 = dma.hbm_to_vmem [thread:$0]  %s0, 256, %s17, [#allocation3], 128, 128, 8
    $region5: #{tpu_custom_call.1} parent=1 // pred_fallthru
      _
    // Predicated region
    $region6: #{tpu_custom_call.1} parent=1 // pred_check
      _
    $region7: #{tpu_custom_call.1} parent=1 // pred_check_branch
      %24 = sbr.rel (0) target = $region9
    $region8: #{tpu_custom_call.1} parent=1 // pred_region
      %s26 = ssub.s32 256, 256
      %27 = vsyncadd [#allocation6], %s26
      %s28 = sshll.u32 [#allocation5], 4
      %s29 = int_to_ptr.vmem [resolvable:$true] %s28
      %34 = dma.hbm_to_vmem [thread:$0]  %s1, 256, %s29, [#allocation6], 64, 64, 4
    $region9: #{tpu_custom_call.1} parent=1 // pred_fallthru
      _
    // Predicated region
    $region10: #{tpu_custom_call.1} parent=1 // pred_check
      _
    $region11: #{tpu_custom_call.1} parent=1 // pred_check_branch
      %36 = sbr.rel (0) target = $region13
    $region12: #{tpu_custom_call.1} parent=1 // pred_region
      _
    $region13: #{tpu_custom_call.1} parent=1 // pred_fallthru
      _
    // Predicated region
    $region14: #{tpu_custom_call.1} parent=1 // pred_check
      _
    $region15: #{tpu_custom_call.1} parent=1 // pred_check_branch
      %38 = sbr.rel (0) target = $region17
    $region16: #{tpu_custom_call.1} parent=1 // pred_region
      %39 = dma.done [#allocation3], 256
    $region17: #{tpu_custom_call.1} parent=1 // pred_fallthru
      _
    // Predicated region
    $region18: #{tpu_custom_call.1} parent=1 // pred_check
      _
    $region19: #{tpu_custom_call.1} parent=1 // pred_check_branch
      %41 = sbr.rel (0) target = $region21
    $region20: #{tpu_custom_call.1} parent=1 // pred_region
      %42 = dma.done [#allocation6], 256
    $region21: #{tpu_custom_call.1} parent=1 // pred_fallthru
      _
    %v44 = vld [vmem:[#allocation2] sm:$0xff]
    %v45 = vld [vmem:[#allocation2 + $0x8] sm:$0xff]
    %v46 = vpack.c.bf16 %v45, %v44
    %v47 = vld [vmem:[#allocation5] sm:$0xf]
    %v48 = vld [vmem:[#allocation5 + $0x4] sm:$0xf]
    %v49 = vld [vmem:[#allocation5 + $0x8] sm:$0xf]
    %v50 = vld [vmem:[#allocation5 + $0xc] sm:$0xf]
    %v51 = vld [vmem:[%s2] sm:$0x1]
    %v53 = vlaneseq
    %v54 = vshrl.u32 %v53, 7
    %v55 = vsub.s32 0, %v54
    %v56 = vrot.slane %v51, %v55
    %v62 = vunpack.c.l.b16 %v47
    %v63 = vunpack.c.l.b16 %v48
    %v64 = vunpack.c.l.b16 %v49
    %v65 = vunpack.c.l.b16 %v50
    %v66 = vpack.c.b16 %v63, %v62
    %v67 = vpack.c.b16 %v65, %v64
    %vm70 = vcmask 261120
    %v72 = vsel %vm70, %v46, 0
    %74 = vmatprep.subr.bf16.mxu0 0
    %75 = vmatpush1.bf16.msra.mxu0 %v66
    %76 = vmatprep.subr.bf16.mxu0 0
    %77 = vmatpush1.bf16.msra.mxu0 %v67
    %78 = vmatprep.subr.bf16.mxu0 0
    %79 = vmatpush1.bf16.msra.mxu0 0
    %80 = vmatprep.subr.bf16.mxu0 0
    %81 = vmatpush1.bf16.msra.mxu0 0
    %82 = vmatprep.subr.bf16.mxu0 0
    %83 = vmatpush1.bf16.msra.mxu0 0
    %84 = vmatprep.subr.bf16.mxu0 0
    %85 = vmatpush1.bf16.msra.mxu0 0
    %86 = vmatprep.subr.bf16.mxu0 0
    %87 = vmatpush1.bf16.msra.mxu0 0
    %88 = vmatprep.subr.bf16.mxu0 0
    %89 = vmatpush1.bf16.msra.mxu0 0
    %90 = vmatprep.subr.bf16.mxu0 0
    %91 = vmatpush1.bf16.msra.mxu0 0
    %92 = vmatprep.subr.bf16.mxu0 0
    %93 = vmatpush1.bf16.msra.mxu0 0
    %94 = vmatprep.subr.bf16.mxu0 0
    %95 = vmatpush1.bf16.msra.mxu0 0
    %96 = vmatprep.subr.bf16.mxu0 0
    %97 = vmatpush1.bf16.msra.mxu0 0
    %98 = vmatprep.subr.bf16.mxu0 0
    %99 = vmatpush1.bf16.msra.mxu0 0
    %100 = vmatprep.subr.bf16.mxu0 0
    %101 = vmatpush1.bf16.msra.mxu0 0
    %102 = vmatprep.subr.bf16.mxu0 0
    %103 = vmatpush1.bf16.msra.mxu0 0
    %104 = vmatprep.subr.bf16.mxu0 0
    %105 = vmatpush1.bf16.msra.mxu0 0
    %106 = vmatprep.mubr.bf16.mxu0 0
    %107 = vmatmul.mubr.bf16.gmra.mrb[0].mxu0 %v72
    %v108 = vpop.f32.mrb[0].mxu0
    %v109 = vadd.f32 %v56, %v108
    %v110 = vpop.f32.mrb[0].mxu0
    %v111 = vpop.f32.mrb[0].mxu0
    %v112 = vadd.f32 %v56, %v111
    %v113 = vpop.f32.mrb[0].mxu0
    %114 = vdwg.mxu0
    %v115 = vmax.f32 %v109, 0.0
    %v116 = vmax.f32 %v112, 0.0
    %vm117 = vcmask 523264
    %118 = vst.msk [vmem:[#allocation7] sm:$0xff] %vm117, %v115
    %119 = vst.msk [vmem:[#allocation7 + $0x8] sm:$0xff] %vm117, %v116
    // Predicated region
    $region22: #{tpu_custom_call.1} parent=1 // pred_check
      _
    $region23: #{tpu_custom_call.1} parent=1 // pred_check_branch
      %121 = sbr.rel (0) target = $region25
    $region24: #{tpu_custom_call.1} parent=1 // pred_region
      %s123 = ssub.s32 256, 256
      %124 = vsyncadd [#allocation4], %s123
      %s125 = sshll.u32 [#allocation7], 4
      %s126 = int_to_ptr.vmem [resolvable:$true] %s125
      %131 = dma.vmem_to_hbm [thread:$0]  %s126, 256, %s3, [#allocation4], 128, 128, 8
    $region25: #{tpu_custom_call.1} parent=1 // pred_fallthru
      _
    // Predicated region
    $region26: #{tpu_custom_call.1} parent=1 // pred_check
      _
    $region27: #{tpu_custom_call.1} parent=1 // pred_check_branch
      %133 = sbr.rel (0) target = $region29
    $region28: #{tpu_custom_call.1} parent=1 // pred_region
      %134 = dma.done [#allocation4], 256
    $region29: #{tpu_custom_call.1} parent=1 // pred_fallthru
      _
    %135 = vsyncpa [#allocation3], 1
    %136 = vsyncpa [#allocation6], 1
    %137 = vsyncpa [#allocation4], 1

</llo_original>
